<compile_context>
chip_gen: v5e
topology: v5e:2x2
jax: 0.10.0
libtpu: 0.0.40
codegen_flags: <defaults>
</compile_context>

<pallas_src>
import functools

import jax
import jax.numpy as jnp
from jax import lax
from jax.experimental import pallas as pl
from jax.experimental.pallas import tpu as pltpu

BN_EPS = 1e-5


# ------------------------------ fused kernel --------------------------------

def _make_dpn_kernel(*, H, W, num_1x1_c, shortcut_width, has_proj):
    """One grid step processes one image entirely in VMEM, channels-first."""
    M = H * W

    def kernel(*refs):
        if has_proj:
            (x_ref, sa, ba, bb, bc, wa, wb, wc, sw, bw, ww, o_ref) = refs
        else:
            (x_ref, sa, ba, bb, bc, wa, wb, wc, o_ref) = refs

        x = x_ref[...]                                         # (Cin, M) f32

        # --- residual path: BN + ReLU -> 1x1 conv (c1x1_a); sb folded into wa
        act_a = jnp.maximum(x * sa[...] + ba[...], 0.0).astype(jnp.bfloat16)
        a = jnp.dot(wa[...], act_a, preferred_element_type=jnp.float32)

        # --- stage b pre-activation: only +bias and ReLU remain; cast ONCE ---
        act_b = jnp.maximum(a + bb[...], 0.0).astype(jnp.bfloat16)   # (Ca, M)
        Ca = act_b.shape[0]

        # --- grouped 3x3 SAME conv as ONE matmul over K = 9*Ca --------------
        # tap_t[c, y*W+x] = act_b[c, (y+dy)*W + (x+dx)] with zero fill outside
        # the image.  Row overflow is handled by the zero-fill shift; only the
        # column-wrap cases (dx = +/-1) need a lane mask.
        col = lax.broadcasted_iota(jnp.int32, (Ca, M), 1) % W
        mask_l = col >= 1            # valid lanes when dx = -1
        mask_r = col < (W - 1)       # valid lanes when dx = +1

        def shift_flat(arr, s):      # tap[:, i] = arr[:, i+s], zero-filled
            if s == 0:
                return arr
            z = jnp.zeros((arr.shape[0], abs(s)), arr.dtype)
            if s > 0:
                return jnp.concatenate([arr[:, s:], z], axis=1)
            return jnp.concatenate([z, arr[:, :s]], axis=1)

        taps = []
        for t in range(9):                                     # static unroll
            dy, dx = t // 3 - 1, t % 3 - 1
            tap = shift_flat(act_b, dy * W + dx)
            if dx == -1:
                tap = jnp.where(mask_l, tap, 0.0)
            elif dx == 1:
                tap = jnp.where(mask_r, tap, 0.0)
            taps.append(tap)
        taps = jnp.concatenate(taps, axis=0)                   # (9*Ca, M) bf16
        b = jnp.dot(wb[...], taps, preferred_element_type=jnp.float32)

        # --- stage c: +bias + ReLU (sc folded into wb) -> 1x1 conv (c1x1_c) --
        act_c = jnp.maximum(b + bc[...], 0.0).astype(jnp.bfloat16)
        out = jnp.dot(wc[...], act_c, preferred_element_type=jnp.float32)

        # --- shortcut: 1x1 projection (proj) or identity (normal) -----------
        if has_proj:
            act_w = jnp.maximum(x * sw[...] + bw[...], 0.0).astype(jnp.bfloat16)
            data_o = jnp.dot(ww[...], act_w, preferred_element_type=jnp.float32)
        else:
            data_o = x

        # --- epilogue: residual add + dense concat via aligned sub-stores ----
        o_ref[:num_1x1_c, :] = (data_o[:num_1x1_c] +
                                out[:num_1x1_c]).astype(o_ref.dtype)
        o_ref[num_1x1_c:shortcut_width, :] = data_o[num_1x1_c:].astype(o_ref.dtype)
        o_ref[shortcut_width:, :] = out[num_1x1_c:].astype(o_ref.dtype)

    return kernel


# ------------------------------- wrapper -------------------------------------

def _gconv_weight_cf(w, G, sc):
    """(9, G, cg, cog) grouped taps -> (G*cog, 9*G*cg) block-diag, sc folded.

    Channels-first, tap-concatenated contraction layout for the single-matmul
    grouped conv.  (For production-size G this is G-times inflated vs. the true
    grouped weight; fine at these sizes.)
    """
    nine, _, cg, cog = w.shape
    Ca, Cb = G * cg, G * cog
    wbig = jnp.zeros((Cb, nine * Ca), w.dtype)
    for t in range(nine):
        for g in range(G):
            wbig = wbig.at[g * cog:(g + 1) * cog,
                           t * Ca + g * cg:t * Ca + (g + 1) * cg].set(w[t, g].T)
    return wbig * sc[:, None]


def dual_path_block_forward(params, x, *, num_1x1_c, G, has_proj):
    """x: NCHW tensor, or [summ, dense] list of NCHW tensors (key_stride=1)."""
    data_in = jnp.concatenate(x, axis=1) if isinstance(x, (list, tuple)) else x
    N, Cin, H, W = data_in.shape
    M = H * W
    d = data_in.reshape(N, Cin, M)              # free reshape, stays NCHW-major

    pa, pb, pc = params['c1x1_a'], params['c3x3_b'], params['c1x1_c']
    # channels-first weights with downstream BN scales folded into output rows
    wa = (pa['w'].T * pb['scale'][:, None]).astype(jnp.bfloat16)       # (Ca, Cin)
    wb = _gconv_weight_cf(pb['w'], G, pc['scale']).astype(jnp.bfloat16)  # (Cb, 9*Ca)
    wc = pc['w'].T.astype(jnp.bfloat16)                                # (Cc, Cb)
    Ca, Cb, Cc = wa.shape[0], wb.shape[0], wc.shape[0]

    def colv(v):                                 # (C,) -> (C, 1) row broadcast
        return v.reshape(-1, 1)

    def const_spec(shape):
        nd = len(shape)
        return pl.BlockSpec(shape, lambda n: (0,) * nd)

    args = [d,
            colv(pa['scale']), colv(pa['bias']),
            colv(pb['bias']), colv(pc['bias']),
            wa, wb, wc]
    in_specs = [pl.BlockSpec((None, Cin, M), lambda n: (n, 0, 0)),
                const_spec((Cin, 1)), const_spec((Cin, 1)),
                const_spec((Ca, 1)), const_spec((Cb, 1)),
                const_spec(wa.shape), const_spec(wb.shape), const_spec(wc.shape)]

    if has_proj:
        pw = params['c1x1_w']
        ww = pw['w'].T.astype(jnp.bfloat16)                            # (Cw, Cin)
        args += [colv(pw['scale']), colv(pw['bias']), ww]
        in_specs += [const_spec((Cin, 1)), const_spec((Cin, 1)),
                     const_spec(ww.shape)]
        shortcut_width = ww.shape[0]
    else:
        shortcut_width = Cin

    Ctot = shortcut_width + Cc - num_1x1_c       # rows: summ ++ dense

    out = pl.pallas_call(
        _make_dpn_kernel(H=H, W=W, num_1x1_c=num_1x1_c,
                         shortcut_width=shortcut_width, has_proj=has_proj),
        grid=(N,),
        in_specs=in_specs,
        out_specs=pl.BlockSpec((None, Ctot, M), lambda n: (n, 0, 0)),
        out_shape=jax.ShapeDtypeStruct((N, Ctot, M), jnp.float32),
        compiler_params=pltpu.CompilerParams(
            dimension_semantics=("parallel",)),
    )(*args)

    out = out.reshape(N, Ctot, H, W)             # free reshape, already NCHW
    return [out[:, :num_1x1_c], out[:, num_1x1_c:]]


# ------------------------- parameter initialization --------------------------

def init_bn_relu_conv_params(key, in_chs, out_chs, ksize, groups=1):
    k1, k2, k3, k4, k5 = jax.random.split(key, 5)
    gamma = jax.random.uniform(k1, (in_chs,), jnp.float32, 0.5, 1.5)
    beta = 0.1 * jax.random.normal(k2, (in_chs,), jnp.float32)
    rmean = 0.1 * jax.random.normal(k3, (in_chs,), jnp.float32)
    rvar = jax.random.uniform(k4, (in_chs,), jnp.float32, 0.5, 1.5)
    scale = gamma / jnp.sqrt(rvar + BN_EPS)
    bias = beta - rmean * scale
    if ksize == 1:
        w = jax.random.normal(k5, (in_chs, out_chs), jnp.float32) / jnp.sqrt(in_chs)
    else:
        cg, cog = in_chs // groups, out_chs // groups
        w = jax.random.normal(k5, (9, groups, cg, cog), jnp.float32) / jnp.sqrt(9 * cg)
    return dict(scale=scale, bias=bias, w=w)


# ---------------------------- pure-JAX reference -----------------------------

def _ref_bnrc1x1(d, p):
    act = jnp.maximum(d * p['scale'] + p['bias'], 0.0)
    return jnp.einsum('nhwc,cd->nhwd', act, p['w'])


def _ref_bnrc3x3(d, p, G):
    act = jnp.maximum(d * p['scale'] + p['bias'], 0.0)
    w = p['w']
    cg, cog = w.shape[2], w.shape[3]
    w_hwio = w.reshape(3, 3, G, cg, cog).transpose(0, 1, 3, 2, 4).reshape(3, 3, cg, G * cog)
    return lax.conv_general_dilated(act, w_hwio, (1, 1), 'SAME',
                                    dimension_numbers=('NHWC', 'HWIO', 'NHWC'),
                                    feature_group_count=G)


def reference_forward(params, x, *, num_1x1_c, G, has_proj):
    data_in = jnp.concatenate(x, axis=1) if isinstance(x, (list, tuple)) else x
    d = jnp.transpose(data_in, (0, 2, 3, 1))
    if has_proj:
        data_o = _ref_bnrc1x1(d, params['c1x1_w'])
        o1, o2 = data_o[..., :num_1x1_c], data_o[..., num_1x1_c:]
    else:
        o1, o2 = d[..., :num_1x1_c], d[..., num_1x1_c:]
    a = _ref_bnrc1x1(d, params['c1x1_a'])
    b = _ref_bnrc3x3(a, params['c3x3_b'], G)
    out = _ref_bnrc1x1(b, params['c1x1_c'])
    summ = o1 + out[..., :num_1x1_c]
    dense = jnp.concatenate([o2, out[..., num_1x1_c:]], axis=-1)
    return [jnp.transpose(summ, (0, 3, 1, 2)), jnp.transpose(dense, (0, 3, 1, 2))]


def _check(got, want, tol=5e-2):
    # scaled max-error check (bf16 MXU operands => ~1-2% expected worst case)
    err = float(jnp.max(jnp.abs(got - want)) /
                jnp.maximum(1.0, jnp.max(jnp.abs(want))))
    assert err < tol, f"scaled max error {err:.4f} >= {tol}"


# ----------------------------------- main -------------------------------------

if __name__ == "__main__":
    # DualPathBlock(in_chs=16, num_1x1_a=16, num_3x3_b=16, num_1x1_c=16,
    #               inc=8, G=4, _type='proj') followed by a 'normal' block.
    N, H, W = 2, 16, 16
    in_chs, num_1x1_a, num_3x3_b, num_1x1_c, inc, G = 16, 16, 16, 16, 8, 4

    key = jax.random.PRNGKey(0)
    kx, kw, ka, kb, kc, ka2, kb2, kc2 = jax.random.split(key, 8)
    x = jax.random.normal(kx, (N, in_chs, H, W), jnp.float32)

    proj_params = {
        'c1x1_w': init_bn_relu_conv_params(kw, in_chs, num_1x1_c + 2 * inc, 1),
        'c1x1_a': init_bn_relu_conv_params(ka, in_chs, num_1x1_a, 1),
        'c3x3_b': init_bn_relu_conv_params(kb, num_1x1_a, num_3x3_b, 3, groups=G),
        'c1x1_c': init_bn_relu_conv_params(kc, num_3x3_b, num_1x1_c + inc, 1),
    }

    fwd_proj = jax.jit(functools.partial(dual_path_block_forward,
                                         num_1x1_c=num_1x1_c, G=G, has_proj=True))
    summ, dense = fwd_proj(proj_params, x)
    jax.block_until_ready(summ)
    jax.block_until_ready(dense)

    ref_summ, ref_dense = reference_forward(proj_params, x, num_1x1_c=num_1x1_c,
                                            G=G, has_proj=True)
    assert summ.shape == (N, num_1x1_c, H, W)
    assert dense.shape == (N, 3 * inc, H, W)
    _check(summ, ref_summ)
    _check(dense, ref_dense)

    # 'normal' block consuming [summ, dense] (identity shortcut path)
    in_chs2 = num_1x1_c + 3 * inc
    normal_params = {
        'c1x1_a': init_bn_relu_conv_params(ka2, in_chs2, num_1x1_a, 1),
        'c3x3_b': init_bn_relu_conv_params(kb2, num_1x1_a, num_3x3_b, 3, groups=G),
        'c1x1_c': init_bn_relu_conv_params(kc2, num_3x3_b, num_1x1_c + inc, 1),
    }
    fwd_norm = jax.jit(functools.partial(dual_path_block_forward,
                                         num_1x1_c=num_1x1_c, G=G, has_proj=False))
    summ2, dense2 = fwd_norm(normal_params, [summ, dense])
    jax.block_until_ready(summ2)
    jax.block_until_ready(dense2)

    ref_summ2, ref_dense2 = reference_forward(normal_params, [summ, dense],
                                              num_1x1_c=num_1x1_c, G=G,
                                              has_proj=False)
    assert summ2.shape == (N, num_1x1_c, H, W)
    assert dense2.shape == (N, 4 * inc, H, W)
    _check(summ2, ref_summ2)
    _check(dense2, ref_dense2)

    print("KERNEL_OK")
</pallas_src>

<mosaic_0001>
module attributes {stable_mosaic.version = 11 : i64} {
  func.func @kernel(%arg0: i32, %arg1: memref<1x16x256xf32, #tpu.memory_space<vmem>>, %arg2: memref<16x1xf32, #tpu.memory_space<vmem>>, %arg3: memref<16x1xf32, #tpu.memory_space<vmem>>, %arg4: memref<16x1xf32, #tpu.memory_space<vmem>>, %arg5: memref<16x1xf32, #tpu.memory_space<vmem>>, %arg6: memref<16x16xbf16, #tpu.memory_space<vmem>>, %arg7: memref<16x144xbf16, #tpu.memory_space<vmem>>, %arg8: memref<24x16xbf16, #tpu.memory_space<vmem>>, %arg9: memref<16x1xf32, #tpu.memory_space<vmem>>, %arg10: memref<16x1xf32, #tpu.memory_space<vmem>>, %arg11: memref<32x16xbf16, #tpu.memory_space<vmem>>, %arg12: memref<1x40x256xf32, #tpu.memory_space<vmem>>) attributes {dimension_semantics = [#tpu.dimension_semantics<parallel>], iteration_bounds = array<i64: 2>, scalar_prefetch = 0 : i64, scratch_operands = 0 : i64, tpu.core_type = #tpu.core_type<tc>, window_params = [{transform_indices = @transform_0, window_bounds = array<i64: 1, 16, 256>}, {pipeline_mode = #tpu.pipeline_mode<synchronous>, transform_indices = @transform_1, window_bounds = array<i64: 16, 1>}, {pipeline_mode = #tpu.pipeline_mode<synchronous>, transform_indices = @transform_2, window_bounds = array<i64: 16, 1>}, {pipeline_mode = #tpu.pipeline_mode<synchronous>, transform_indices = @transform_3, window_bounds = array<i64: 16, 1>}, {pipeline_mode = #tpu.pipeline_mode<synchronous>, transform_indices = @transform_4, window_bounds = array<i64: 16, 1>}, {pipeline_mode = #tpu.pipeline_mode<synchronous>, transform_indices = @transform_5, window_bounds = array<i64: 16, 16>}, {pipeline_mode = #tpu.pipeline_mode<synchronous>, transform_indices = @transform_6, window_bounds = array<i64: 16, 144>}, {pipeline_mode = #tpu.pipeline_mode<synchronous>, transform_indices = @transform_7, window_bounds = array<i64: 24, 16>}, {pipeline_mode = #tpu.pipeline_mode<synchronous>, transform_indices = @transform_8, window_bounds = array<i64: 16, 1>}, {pipeline_mode = #tpu.pipeline_mode<synchronous>, transform_indices = @transform_9, window_bounds = array<i64: 16, 1>}, {pipeline_mode = #tpu.pipeline_mode<synchronous>, transform_indices = @transform_10, window_bounds = array<i64: 32, 16>}, {transform_indices = @transform_11, window_bounds = array<i64: 1, 40, 256>}]} {
    %c0 = arith.constant 0 : index
    %c0_0 = arith.constant 0 : index
    %c0_1 = arith.constant 0 : index
    %0 = vector.load %arg1[%c0, %c0_0, %c0_1] : memref<1x16x256xf32, #tpu.memory_space<vmem>>, vector<1x16x256xf32>
    %1 = vector.shape_cast %0 : vector<1x16x256xf32> to vector<16x256xf32>
    %c0_2 = arith.constant 0 : index
    %c0_3 = arith.constant 0 : index
    %2 = vector.load %arg2[%c0_2, %c0_3] : memref<16x1xf32, #tpu.memory_space<vmem>>, vector<16x1xf32>
    %3 = vector.broadcast %2 : vector<16x1xf32> to vector<16x256xf32>
    %4 = arith.mulf %1, %3 : vector<16x256xf32>
    %c0_4 = arith.constant 0 : index
    %c0_5 = arith.constant 0 : index
    %5 = vector.load %arg3[%c0_4, %c0_5] : memref<16x1xf32, #tpu.memory_space<vmem>>, vector<16x1xf32>
    %6 = vector.broadcast %5 : vector<16x1xf32> to vector<16x256xf32>
    %7 = arith.addf %4, %6 : vector<16x256xf32>
    %cst = arith.constant 0.000000e+00 : f32
    %8 = vector.broadcast %cst : f32 to vector<16x256xf32>
    %9 = arith.maximumf %7, %8 : vector<16x256xf32>
    %10 = arith.truncf %9 : vector<16x256xf32> to vector<16x256xbf16>
    %c0_6 = arith.constant 0 : index
    %c0_7 = arith.constant 0 : index
    %11 = vector.load %arg6[%c0_6, %c0_7] : memref<16x16xbf16, #tpu.memory_space<vmem>>, vector<16x16xbf16>
    %cst_8 = arith.constant dense<0.000000e+00> : vector<16x256xf32>
    %12 = tpu.matmul %11, %10, %cst_8 {dimension_numbers = #tpu.dot_dimension_numbers<[1], [0], [0], [1], [0, 0, 1, 1], [], []>} : vector<16x16xbf16>, vector<16x256xbf16>, vector<16x256xf32> -> vector<16x256xf32>
    %c0_9 = arith.constant 0 : index
    %c0_10 = arith.constant 0 : index
    %13 = vector.load %arg4[%c0_9, %c0_10] : memref<16x1xf32, #tpu.memory_space<vmem>>, vector<16x1xf32>
    %14 = vector.broadcast %13 : vector<16x1xf32> to vector<16x256xf32>
    %15 = arith.addf %12, %14 : vector<16x256xf32>
    %cst_11 = arith.constant 0.000000e+00 : f32
    %16 = vector.broadcast %cst_11 : f32 to vector<16x256xf32>
    %17 = arith.maximumf %15, %16 : vector<16x256xf32>
    %18 = arith.truncf %17 : vector<16x256xf32> to vector<16x256xbf16>
    %19 = tpu.iota {dimensions = array<i32: 1>} : vector<16x256xi32>
    %c16_i32 = arith.constant 16 : i32
    %c0_i32 = arith.constant 0 : i32
    %20 = arith.cmpi eq, %c16_i32, %c0_i32 : i32
    %c1_i32 = arith.constant 1 : i32
    %21 = arith.select %20, %c1_i32, %c16_i32 : i32
    %22 = vector.broadcast %21 : i32 to vector<16x256xi32>
    %23 = arith.remsi %19, %22 : vector<16x256xi32>
    %c0_i32_12 = arith.constant 0 : i32
    %24 = vector.broadcast %c0_i32_12 : i32 to vector<16x256xi32>
    %25 = arith.cmpi ne, %23, %24 : vector<16x256xi32>
    %c0_i32_13 = arith.constant 0 : i32
    %26 = vector.broadcast %c0_i32_13 : i32 to vector<16x256xi32>
    %27 = arith.cmpi slt, %23, %26 : vector<16x256xi32>
    %c0_i32_14 = arith.constant 0 : i32
    %28 = arith.cmpi slt, %21, %c0_i32_14 : i32
    %29 = vector.broadcast %28 : i1 to vector<16x256xi1>
    %30 = vector.broadcast %29 : vector<16x256xi1> to vector<16x256xi1>
    %31 = arith.xori %27, %30 : vector<16x256xi1>
    %32 = arith.andi %31, %25 : vector<16x256xi1>
    %33 = vector.broadcast %21 : i32 to vector<16x256xi32>
    %34 = arith.addi %23, %33 : vector<16x256xi32>
    %35 = arith.select %32, %34, %23 : vector<16x256xi1>, vector<16x256xi32>
    %c1_i32_15 = arith.constant 1 : i32
    %36 = vector.broadcast %c1_i32_15 : i32 to vector<16x256xi32>
    %37 = arith.cmpi sge, %35, %36 : vector<16x256xi32>
    %c15_i32 = arith.constant 15 : i32
    %38 = vector.broadcast %c15_i32 : i32 to vector<16x256xi32>
    %39 = arith.cmpi slt, %35, %38 : vector<16x256xi32>
    %cst_16 = arith.constant 0.000000e+00 : bf16
    %40 = vector.broadcast %cst_16 : bf16 to vector<16x17xbf16>
    %41 = vector.extract_strided_slice %18 {offsets = [0, 0], sizes = [16, 239], strides = [1, 1]} : vector<16x256xbf16> to vector<16x239xbf16>
    %42 = tpu.concatenate %40, %41 in 1 : vector<16x17xbf16>, vector<16x239xbf16> -> vector<16x256xbf16>
    %cst_17 = arith.constant 0.000000e+00 : f32
    %43 = arith.truncf %cst_17 : f32 to bf16
    %44 = vector.broadcast %43 : bf16 to vector<16x256xbf16>
    %45 = arith.select %37, %42, %44 : vector<16x256xi1>, vector<16x256xbf16>
    %cst_18 = arith.constant 0.000000e+00 : bf16
    %46 = vector.broadcast %cst_18 : bf16 to vector<16x16xbf16>
    %47 = vector.extract_strided_slice %18 {offsets = [0, 0], sizes = [16, 240], strides = [1, 1]} : vector<16x256xbf16> to vector<16x240xbf16>
    %48 = tpu.concatenate %46, %47 in 1 : vector<16x16xbf16>, vector<16x240xbf16> -> vector<16x256xbf16>
    %cst_19 = arith.constant 0.000000e+00 : bf16
    %49 = vector.broadcast %cst_19 : bf16 to vector<16x15xbf16>
    %50 = vector.extract_strided_slice %18 {offsets = [0, 0], sizes = [16, 241], strides = [1, 1]} : vector<16x256xbf16> to vector<16x241xbf16>
    %51 = tpu.concatenate %49, %50 in 1 : vector<16x15xbf16>, vector<16x241xbf16> -> vector<16x256xbf16>
    %cst_20 = arith.constant 0.000000e+00 : f32
    %52 = arith.truncf %cst_20 : f32 to bf16
    %53 = vector.broadcast %52 : bf16 to vector<16x256xbf16>
    %54 = arith.select %39, %51, %53 : vector<16x256xi1>, vector<16x256xbf16>
    %cst_21 = arith.constant 0.000000e+00 : bf16
    %55 = vector.broadcast %cst_21 : bf16 to vector<16x1xbf16>
    %56 = vector.extract_strided_slice %18 {offsets = [0, 0], sizes = [16, 255], strides = [1, 1]} : vector<16x256xbf16> to vector<16x255xbf16>
    %57 = tpu.concatenate %55, %56 in 1 : vector<16x1xbf16>, vector<16x255xbf16> -> vector<16x256xbf16>
    %cst_22 = arith.constant 0.000000e+00 : f32
    %58 = arith.truncf %cst_22 : f32 to bf16
    %59 = vector.broadcast %58 : bf16 to vector<16x256xbf16>
    %60 = arith.select %37, %57, %59 : vector<16x256xi1>, vector<16x256xbf16>
    %cst_23 = arith.constant 0.000000e+00 : bf16
    %61 = vector.broadcast %cst_23 : bf16 to vector<16x1xbf16>
    %62 = vector.extract_strided_slice %18 {offsets = [0, 1], sizes = [16, 255], strides = [1, 1]} : vector<16x256xbf16> to vector<16x255xbf16>
    %63 = tpu.concatenate %62, %61 in 1 : vector<16x255xbf16>, vector<16x1xbf16> -> vector<16x256xbf16>
    %cst_24 = arith.constant 0.000000e+00 : f32
    %64 = arith.truncf %cst_24 : f32 to bf16
    %65 = vector.broadcast %64 : bf16 to vector<16x256xbf16>
    %66 = arith.select %39, %63, %65 : vector<16x256xi1>, vector<16x256xbf16>
    %cst_25 = arith.constant 0.000000e+00 : bf16
    %67 = vector.broadcast %cst_25 : bf16 to vector<16x15xbf16>
    %68 = vector.extract_strided_slice %18 {offsets = [0, 15], sizes = [16, 241], strides = [1, 1]} : vector<16x256xbf16> to vector<16x241xbf16>
    %69 = tpu.concatenate %68, %67 in 1 : vector<16x241xbf16>, vector<16x15xbf16> -> vector<16x256xbf16>
    %cst_26 = arith.constant 0.000000e+00 : f32
    %70 = arith.truncf %cst_26 : f32 to bf16
    %71 = vector.broadcast %70 : bf16 to vector<16x256xbf16>
    %72 = arith.select %37, %69, %71 : vector<16x256xi1>, vector<16x256xbf16>
    %cst_27 = arith.constant 0.000000e+00 : bf16
    %73 = vector.broadcast %cst_27 : bf16 to vector<16x16xbf16>
    %74 = vector.extract_strided_slice %18 {offsets = [0, 16], sizes = [16, 240], strides = [1, 1]} : vector<16x256xbf16> to vector<16x240xbf16>
    %75 = tpu.concatenate %74, %73 in 1 : vector<16x240xbf16>, vector<16x16xbf16> -> vector<16x256xbf16>
    %cst_28 = arith.constant 0.000000e+00 : bf16
    %76 = vector.broadcast %cst_28 : bf16 to vector<16x17xbf16>
    %77 = vector.extract_strided_slice %18 {offsets = [0, 17], sizes = [16, 239], strides = [1, 1]} : vector<16x256xbf16> to vector<16x239xbf16>
    %78 = tpu.concatenate %77, %76 in 1 : vector<16x239xbf16>, vector<16x17xbf16> -> vector<16x256xbf16>
    %cst_29 = arith.constant 0.000000e+00 : f32
    %79 = arith.truncf %cst_29 : f32 to bf16
    %80 = vector.broadcast %79 : bf16 to vector<16x256xbf16>
    %81 = arith.select %39, %78, %80 : vector<16x256xi1>, vector<16x256xbf16>
    %82 = tpu.concatenate %45, %48, %54, %60, %18, %66, %72, %75, %81 in 0 : vector<16x256xbf16>, vector<16x256xbf16>, vector<16x256xbf16>, vector<16x256xbf16>, vector<16x256xbf16>, vector<16x256xbf16>, vector<16x256xbf16>, vector<16x256xbf16>, vector<16x256xbf16> -> vector<144x256xbf16>
    %c0_30 = arith.constant 0 : index
    %c0_31 = arith.constant 0 : index
    %83 = vector.load %arg7[%c0_30, %c0_31] : memref<16x144xbf16, #tpu.memory_space<vmem>>, vector<16x144xbf16>
    %cst_32 = arith.constant dense<0.000000e+00> : vector<16x256xf32>
    %84 = tpu.matmul %83, %82, %cst_32 {dimension_numbers = #tpu.dot_dimension_numbers<[1], [0], [0], [1], [0, 0, 1, 1], [], []>} : vector<16x144xbf16>, vector<144x256xbf16>, vector<16x256xf32> -> vector<16x256xf32>
    %c0_33 = arith.constant 0 : index
    %c0_34 = arith.constant 0 : index
    %85 = vector.load %arg5[%c0_33, %c0_34] : memref<16x1xf32, #tpu.memory_space<vmem>>, vector<16x1xf32>
    %86 = vector.broadcast %85 : vector<16x1xf32> to vector<16x256xf32>
    %87 = arith.addf %84, %86 : vector<16x256xf32>
    %cst_35 = arith.constant 0.000000e+00 : f32
    %88 = vector.broadcast %cst_35 : f32 to vector<16x256xf32>
    %89 = arith.maximumf %87, %88 : vector<16x256xf32>
    %90 = arith.truncf %89 : vector<16x256xf32> to vector<16x256xbf16>
    %c0_36 = arith.constant 0 : index
    %c0_37 = arith.constant 0 : index
    %91 = vector.load %arg8[%c0_36, %c0_37] : memref<24x16xbf16, #tpu.memory_space<vmem>>, vector<24x16xbf16>
    %cst_38 = arith.constant dense<0.000000e+00> : vector<24x256xf32>
    %92 = tpu.matmul %91, %90, %cst_38 {dimension_numbers = #tpu.dot_dimension_numbers<[1], [0], [0], [1], [0, 0, 1, 1], [], []>} : vector<24x16xbf16>, vector<16x256xbf16>, vector<24x256xf32> -> vector<24x256xf32>
    %c0_39 = arith.constant 0 : index
    %c0_40 = arith.constant 0 : index
    %93 = vector.load %arg9[%c0_39, %c0_40] : memref<16x1xf32, #tpu.memory_space<vmem>>, vector<16x1xf32>
    %94 = vector.broadcast %93 : vector<16x1xf32> to vector<16x256xf32>
    %95 = arith.mulf %1, %94 : vector<16x256xf32>
    %c0_41 = arith.constant 0 : index
    %c0_42 = arith.constant 0 : index
    %96 = vector.load %arg10[%c0_41, %c0_42] : memref<16x1xf32, #tpu.memory_space<vmem>>, vector<16x1xf32>
    %97 = vector.broadcast %96 : vector<16x1xf32> to vector<16x256xf32>
    %98 = arith.addf %95, %97 : vector<16x256xf32>
    %cst_43 = arith.constant 0.000000e+00 : f32
    %99 = vector.broadcast %cst_43 : f32 to vector<16x256xf32>
    %100 = arith.maximumf %98, %99 : vector<16x256xf32>
    %101 = arith.truncf %100 : vector<16x256xf32> to vector<16x256xbf16>
    %c0_44 = arith.constant 0 : index
    %c0_45 = arith.constant 0 : index
    %102 = vector.load %arg11[%c0_44, %c0_45] : memref<32x16xbf16, #tpu.memory_space<vmem>>, vector<32x16xbf16>
    %cst_46 = arith.constant dense<0.000000e+00> : vector<32x256xf32>
    %103 = tpu.matmul %102, %101, %cst_46 {dimension_numbers = #tpu.dot_dimension_numbers<[1], [0], [0], [1], [0, 0, 1, 1], [], []>} : vector<32x16xbf16>, vector<16x256xbf16>, vector<32x256xf32> -> vector<32x256xf32>
    %104 = vector.extract_strided_slice %103 {offsets = [0, 0], sizes = [16, 256], strides = [1, 1]} : vector<32x256xf32> to vector<16x256xf32>
    %105 = vector.extract_strided_slice %92 {offsets = [0, 0], sizes = [16, 256], strides = [1, 1]} : vector<24x256xf32> to vector<16x256xf32>
    %106 = arith.addf %104, %105 : vector<16x256xf32>
    %c0_47 = arith.constant 0 : index
    %c0_48 = arith.constant 0 : index
    %c0_49 = arith.constant 0 : index
    %107 = vector.load %arg12[%c0_47, %c0_48, %c0_49] : memref<1x40x256xf32, #tpu.memory_space<vmem>>, vector<1x16x256xf32>
    %108 = vector.shape_cast %107 : vector<1x16x256xf32> to vector<16x256xf32>
    %109 = vector.shape_cast %106 : vector<16x256xf32> to vector<1x16x256xf32>
    tpu.vector_store %arg12[%c0_47, %c0_48, %c0_49], %109 {strides = array<i32>} : memref<1x40x256xf32, #tpu.memory_space<vmem>>, vector<1x16x256xf32>,
    %110 = vector.extract_strided_slice %103 {offsets = [16, 0], sizes = [16, 256], strides = [1, 1]} : vector<32x256xf32> to vector<16x256xf32>
    %c0_50 = arith.constant 0 : index
    %c16 = arith.constant 16 : index
    %c0_51 = arith.constant 0 : index
    %111 = vector.load %arg12[%c0_50, %c16, %c0_51] : memref<1x40x256xf32, #tpu.memory_space<vmem>>, vector<1x16x256xf32>
    %112 = vector.shape_cast %111 : vector<1x16x256xf32> to vector<16x256xf32>
    %113 = vector.shape_cast %110 : vector<16x256xf32> to vector<1x16x256xf32>
    tpu.vector_store %arg12[%c0_50, %c16, %c0_51], %113 {strides = array<i32>} : memref<1x40x256xf32, #tpu.memory_space<vmem>>, vector<1x16x256xf32>,
    %114 = vector.extract_strided_slice %92 {offsets = [16, 0], sizes = [8, 256], strides = [1, 1]} : vector<24x256xf32> to vector<8x256xf32>
    %c0_52 = arith.constant 0 : index
    %c32 = arith.constant 32 : index
    %c0_53 = arith.constant 0 : index
    %115 = vector.load %arg12[%c0_52, %c32, %c0_53] : memref<1x40x256xf32, #tpu.memory_space<vmem>>, vector<1x8x256xf32>
    %116 = vector.shape_cast %115 : vector<1x8x256xf32> to vector<8x256xf32>
    %117 = vector.shape_cast %114 : vector<8x256xf32> to vector<1x8x256xf32>
    tpu.vector_store %arg12[%c0_52, %c32, %c0_53], %117 {strides = array<i32>} : memref<1x40x256xf32, #tpu.memory_space<vmem>>, vector<1x8x256xf32>,
    return
  }
  func.func @transform_0(%arg0: i32) -> (i32, i32, i32) {
    %c0_i32 = arith.constant 0 : i32
    %c0_i32_0 = arith.constant 0 : i32
    %c0_i32_1 = arith.constant 0 : i32
    return %arg0, %c0_i32, %c0_i32_0 : i32, i32, i32
  }
  func.func @transform_1(%arg0: i32) -> (i32, i32) {
    %c0_i32 = arith.constant 0 : i32
    %c0_i32_0 = arith.constant 0 : i32
    %c0_i32_1 = arith.constant 0 : i32
    return %c0_i32, %c0_i32_0 : i32, i32
  }
  func.func @transform_2(%arg0: i32) -> (i32, i32) {
    %c0_i32 = arith.constant 0 : i32
    %c0_i32_0 = arith.constant 0 : i32
    %c0_i32_1 = arith.constant 0 : i32
    return %c0_i32, %c0_i32_0 : i32, i32
  }
  func.func @transform_3(%arg0: i32) -> (i32, i32) {
    %c0_i32 = arith.constant 0 : i32
    %c0_i32_0 = arith.constant 0 : i32
    %c0_i32_1 = arith.constant 0 : i32
    return %c0_i32, %c0_i32_0 : i32, i32
  }
  func.func @transform_4(%arg0: i32) -> (i32, i32) {
    %c0_i32 = arith.constant 0 : i32
    %c0_i32_0 = arith.constant 0 : i32
    %c0_i32_1 = arith.constant 0 : i32
    return %c0_i32, %c0_i32_0 : i32, i32
  }
  func.func @transform_5(%arg0: i32) -> (i32, i32) {
    %c0_i32 = arith.constant 0 : i32
    %c0_i32_0 = arith.constant 0 : i32
    %c0_i32_1 = arith.constant 0 : i32
    return %c0_i32, %c0_i32_0 : i32, i32
  }
  func.func @transform_6(%arg0: i32) -> (i32, i32) {
    %c0_i32 = arith.constant 0 : i32
    %c0_i32_0 = arith.constant 0 : i32
    %c0_i32_1 = arith.constant 0 : i32
    return %c0_i32, %c0_i32_0 : i32, i32
  }
  func.func @transform_7(%arg0: i32) -> (i32, i32) {
    %c0_i32 = arith.constant 0 : i32
    %c0_i32_0 = arith.constant 0 : i32
    %c0_i32_1 = arith.constant 0 : i32
    return %c0_i32, %c0_i32_0 : i32, i32
  }
  func.func @transform_8(%arg0: i32) -> (i32, i32) {
    %c0_i32 = arith.constant 0 : i32
    %c0_i32_0 = arith.constant 0 : i32
    %c0_i32_1 = arith.constant 0 : i32
    return %c0_i32, %c0_i32_0 : i32, i32
  }
  func.func @transform_9(%arg0: i32) -> (i32, i32) {
    %c0_i32 = arith.constant 0 : i32
    %c0_i32_0 = arith.constant 0 : i32
    %c0_i32_1 = arith.constant 0 : i32
    return %c0_i32, %c0_i32_0 : i32, i32
  }
  func.func @transform_10(%arg0: i32) -> (i32, i32) {
    %c0_i32 = arith.constant 0 : i32
    %c0_i32_0 = arith.constant 0 : i32
    %c0_i32_1 = arith.constant 0 : i32
    return %c0_i32, %c0_i32_0 : i32, i32
  }
  func.func @transform_11(%arg0: i32) -> (i32, i32, i32) {
    %c0_i32 = arith.constant 0 : i32
    %c0_i32_0 = arith.constant 0 : i32
    %c0_i32_1 = arith.constant 0 : i32
    return %arg0, %c0_i32, %c0_i32_0 : i32, i32, i32
  }
}

</mosaic_0001>

<llo_original>
// kernel: dual_path_block_forward.1
$region0: #{dual_path_block_forward.1}
  #allocation0 [shape = 'u32[]', space=smem, size = 0x4, offset = 0x4, fixed_abs, tag = 'smem constant byte address 0x4 - core index']
  #allocation1 [shape = 'u32[72,128]{1,0:T(1,128)}', space=vmem, size = 0x9000, scoped, tag = 'internal scratch']
  %s0 = inlined_call_operand.vmem [shape: f32[2,16,256], index: 0, kind: input, shape index: {}]
  %s1 = inlined_call_operand.vmem [shape: f32[16,1], index: 1, kind: input, shape index: {}]
  %s2 = inlined_call_operand.vmem [shape: f32[16,1], index: 2, kind: input, shape index: {}]
  %s3 = inlined_call_operand.vmem [shape: f32[16,1], index: 3, kind: input, shape index: {}]
  %s4 = inlined_call_operand.vmem [shape: f32[16,1], index: 4, kind: input, shape index: {}]
  %s5 = inlined_call_operand.vmem [shape: bf16[16,16], index: 5, kind: input, shape index: {}]
  %s6 = inlined_call_operand.vmem [shape: bf16[16,144], index: 6, kind: input, shape index: {}]
  %s7 = inlined_call_operand.vmem [shape: bf16[24,16], index: 7, kind: input, shape index: {}]
  %s8 = inlined_call_operand.vmem [shape: f32[16,1], index: 8, kind: input, shape index: {}]
  %s9 = inlined_call_operand.vmem [shape: f32[16,1], index: 9, kind: input, shape index: {}]
  %s10 = inlined_call_operand.vmem [shape: bf16[32,16], index: 10, kind: input, shape index: {}]
  %s11 = inlined_call_operand.vmem [shape: f32[2,40,256], index: 11, kind: output, shape index: {}]
  %s12 = sld [smem:[#allocation0]]
  $region77: #{dual_path_block_forward.1} parent=0
    _
  %s14 = ssub.s32 1, %s12
  %s15 = scalar_select 0, %s14, %s12
  loop: start=0, step=1, limit=4
  $region2: #{dual_path_block_forward.1} parent=0 // loop_pre_header
    _
  $region3: #{dual_path_block_forward.1} parent=0 // loop_header
    %s17 = sphi 0, %s21
    %p18 = scmp.ge.s32.totalorder %s17, 4
    %s27 = sphi 0, %s29
    %s30 = sphi 0, %s27
    %s31 = sphi 0, %s30
    %s47 = sphi 0, %s31
    %s51 = sphi 0, %s51
    %s53 = sphi 0, %s51
    %s54 = sphi 0, %s53
    %s68 = sphi 0, %s54
    %s72 = sphi 0, %s72
    %s74 = sphi 0, %s72
    %s75 = sphi 0, %s74
    %s89 = sphi 0, %s75
    %s93 = sphi 0, %s93
    %s95 = sphi 0, %s93
    %s96 = sphi 0, %s95
    %s110 = sphi 0, %s96
    %s114 = sphi 0, %s114
    %s116 = sphi 0, %s114
    %s117 = sphi 0, %s116
    %s131 = sphi 0, %s117
    %s135 = sphi 0, %s135
    %s137 = sphi 0, %s135
    %s138 = sphi 0, %s137
    %s152 = sphi 0, %s138
    %s156 = sphi 0, %s156
    %s158 = sphi 0, %s156
    %s159 = sphi 0, %s158
    %s173 = sphi 0, %s159
    %s177 = sphi 0, %s177
    %s179 = sphi 0, %s177
    %s180 = sphi 0, %s179
    %s194 = sphi 0, %s180
    %s198 = sphi 0, %s198
    %s200 = sphi 0, %s198
    %s201 = sphi 0, %s200
    %s215 = sphi 0, %s201
    %s219 = sphi 0, %s219
    %s221 = sphi 0, %s219
    %s222 = sphi 0, %s221
    %s236 = sphi 0, %s222
    %s240 = sphi 0, %s240
    %s242 = sphi 0, %s240
    %s243 = sphi 0, %s242
    %s257 = sphi 0, %s243
    %s263 = sphi 0, %s265
    %s266 = sphi 0, %s263
    %s267 = sphi 0, %s266
    %s283 = sphi 0, %s267
  $region4: #{dual_path_block_forward.1} parent=0 // loop_header_branch
    %20 = sbr.rel (%p18) target = $region8
  $region5: #{dual_path_block_forward.1} parent=0 // loop_body
    %s22 = ssub.s32 %s17, 1
    %s23 = ssub.s32 %s17, 2
    %s24 = sadd.s32 %s17, 1
    %s25 = ssub.s32 %s17, %s24
    %p26 = scmp.eq.s32.totalorder %s25, 0
    %s28 = sadd.s32 %s27, 1
    %s29 = scalar_select %p26, %s27, %s28
    %p32 = pneg %p26
    %p33 = scmp.eq.s32.totalorder %s17, 1
    %p34 = por %p32, %p33
    %p35 = scmp.ne.s32.totalorder %s27, %s30
    %p36 = scmp.eq.s32.totalorder %s17, 0
    %p37 = por %p35, %p36
    %p38 = scmp.ne.s32.totalorder %s27, %s30
    %p39 = scmp.eq.s32.totalorder %s22, 1
    %p40 = por %p38, %p39
    %p41 = scmp.ne.s32.totalorder %s30, %s31
    %p42 = scmp.eq.s32.totalorder %s22, 0
    %p43 = por %p41, %p42
    %p44 = scmp.ne.s32.totalorder %s30, %s31
    %p45 = scmp.eq.s32.totalorder %s23, 1
    %p46 = por %p44, %p45
    %p48 = scmp.ne.s32.totalorder %s31, %s47
    %p49 = scmp.eq.s32.totalorder %s23, 0
    %p50 = por %p48, %p49
    %s52 = sadd.s32 %s51, 1
    %p55 = scmp.eq.s32.totalorder %s17, 1
    %p56 = scmp.ne.s32.totalorder %s51, %s53
    %p57 = scmp.eq.s32.totalorder %s17, 0
    %p58 = por %p56, %p57
    %p59 = scmp.ne.s32.totalorder %s51, %s53
    %p60 = scmp.eq.s32.totalorder %s22, 1
    %p61 = por %p59, %p60
    %p62 = scmp.ne.s32.totalorder %s53, %s54
    %p63 = scmp.eq.s32.totalorder %s22, 0
    %p64 = por %p62, %p63
    %p65 = scmp.ne.s32.totalorder %s53, %s54
    %p66 = scmp.eq.s32.totalorder %s23, 1
    %p67 = por %p65, %p66
    %p69 = scmp.ne.s32.totalorder %s54, %s68
    %p70 = scmp.eq.s32.totalorder %s23, 0
    %p71 = por %p69, %p70
    %s73 = sadd.s32 %s72, 1
    %p76 = scmp.eq.s32.totalorder %s17, 1
    %p77 = scmp.ne.s32.totalorder %s72, %s74
    %p78 = scmp.eq.s32.totalorder %s17, 0
    %p79 = por %p77, %p78
    %p80 = scmp.ne.s32.totalorder %s72, %s74
    %p81 = scmp.eq.s32.totalorder %s22, 1
    %p82 = por %p80, %p81
    %p83 = scmp.ne.s32.totalorder %s74, %s75
    %p84 = scmp.eq.s32.totalorder %s22, 0
    %p85 = por %p83, %p84
    %p86 = scmp.ne.s32.totalorder %s74, %s75
    %p87 = scmp.eq.s32.totalorder %s23, 1
    %p88 = por %p86, %p87
    %p90 = scmp.ne.s32.totalorder %s75, %s89
    %p91 = scmp.eq.s32.totalorder %s23, 0
    %p92 = por %p90, %p91
    %s94 = sadd.s32 %s93, 1
    %p97 = scmp.eq.s32.totalorder %s17, 1
    %p98 = scmp.ne.s32.totalorder %s93, %s95
    %p99 = scmp.eq.s32.totalorder %s17, 0
    %p100 = por %p98, %p99
    %p101 = scmp.ne.s32.totalorder %s93, %s95
    %p102 = scmp.eq.s32.totalorder %s22, 1
    %p103 = por %p101, %p102
    %p104 = scmp.ne.s32.totalorder %s95, %s96
    %p105 = scmp.eq.s32.totalorder %s22, 0
    %p106 = por %p104, %p105
    %p107 = scmp.ne.s32.totalorder %s95, %s96
    %p108 = scmp.eq.s32.totalorder %s23, 1
    %p109 = por %p107, %p108
    %p111 = scmp.ne.s32.totalorder %s96, %s110
    %p112 = scmp.eq.s32.totalorder %s23, 0
    %p113 = por %p111, %p112
    %s115 = sadd.s32 %s114, 1
    %p118 = scmp.eq.s32.totalorder %s17, 1
    %p119 = scmp.ne.s32.totalorder %s114, %s116
    %p120 = scmp.eq.s32.totalorder %s17, 0
    %p121 = por %p119, %p120
    %p122 = scmp.ne.s32.totalorder %s114, %s116
    %p123 = scmp.eq.s32.totalorder %s22, 1
    %p124 = por %p122, %p123
    %p125 = scmp.ne.s32.totalorder %s116, %s117
    %p126 = scmp.eq.s32.totalorder %s22, 0
    %p127 = por %p125, %p126
    %p128 = scmp.ne.s32.totalorder %s116, %s117
    %p129 = scmp.eq.s32.totalorder %s23, 1
    %p130 = por %p128, %p129
    %p132 = scmp.ne.s32.totalorder %s117, %s131
    %p133 = scmp.eq.s32.totalorder %s23, 0
    %p134 = por %p132, %p133
    %s136 = sadd.s32 %s135, 1
    %p139 = scmp.eq.s32.totalorder %s17, 1
    %p140 = scmp.ne.s32.totalorder %s135, %s137
    %p141 = scmp.eq.s32.totalorder %s17, 0
    %p142 = por %p140, %p141
    %p143 = scmp.ne.s32.totalorder %s135, %s137
    %p144 = scmp.eq.s32.totalorder %s22, 1
    %p145 = por %p143, %p144
    %p146 = scmp.ne.s32.totalorder %s137, %s138
    %p147 = scmp.eq.s32.totalorder %s22, 0
    %p148 = por %p146, %p147
    %p149 = scmp.ne.s32.totalorder %s137, %s138
    %p150 = scmp.eq.s32.totalorder %s23, 1
    %p151 = por %p149, %p150
    %p153 = scmp.ne.s32.totalorder %s138, %s152
    %p154 = scmp.eq.s32.totalorder %s23, 0
    %p155 = por %p153, %p154
    %s157 = sadd.s32 %s156, 1
    %p160 = scmp.eq.s32.totalorder %s17, 1
    %p161 = scmp.ne.s32.totalorder %s156, %s158
    %p162 = scmp.eq.s32.totalorder %s17, 0
    %p163 = por %p161, %p162
    %p164 = scmp.ne.s32.totalorder %s156, %s158
    %p165 = scmp.eq.s32.totalorder %s22, 1
    %p166 = por %p164, %p165
    %p167 = scmp.ne.s32.totalorder %s158, %s159
    %p168 = scmp.eq.s32.totalorder %s22, 0
    %p169 = por %p167, %p168
    %p170 = scmp.ne.s32.totalorder %s158, %s159
    %p171 = scmp.eq.s32.totalorder %s23, 1
    %p172 = por %p170, %p171
    %p174 = scmp.ne.s32.totalorder %s159, %s173
    %p175 = scmp.eq.s32.totalorder %s23, 0
    %p176 = por %p174, %p175
    %s178 = sadd.s32 %s177, 1
    %p181 = scmp.eq.s32.totalorder %s17, 1
    %p182 = scmp.ne.s32.totalorder %s177, %s179
    %p183 = scmp.eq.s32.totalorder %s17, 0
    %p184 = por %p182, %p183
    %p185 = scmp.ne.s32.totalorder %s177, %s179
    %p186 = scmp.eq.s32.totalorder %s22, 1
    %p187 = por %p185, %p186
    %p188 = scmp.ne.s32.totalorder %s179, %s180
    %p189 = scmp.eq.s32.totalorder %s22, 0
    %p190 = por %p188, %p189
    %p191 = scmp.ne.s32.totalorder %s179, %s180
    %p192 = scmp.eq.s32.totalorder %s23, 1
    %p193 = por %p191, %p192
    %p195 = scmp.ne.s32.totalorder %s180, %s194
    %p196 = scmp.eq.s32.totalorder %s23, 0
    %p197 = por %p195, %p196
    %s199 = sadd.s32 %s198, 1
    %p202 = scmp.eq.s32.totalorder %s17, 1
    %p203 = scmp.ne.s32.totalorder %s198, %s200
    %p204 = scmp.eq.s32.totalorder %s17, 0
    %p205 = por %p203, %p204
    %p206 = scmp.ne.s32.totalorder %s198, %s200
    %p207 = scmp.eq.s32.totalorder %s22, 1
    %p208 = por %p206, %p207
    %p209 = scmp.ne.s32.totalorder %s200, %s201
    %p210 = scmp.eq.s32.totalorder %s22, 0
    %p211 = por %p209, %p210
    %p212 = scmp.ne.s32.totalorder %s200, %s201
    %p213 = scmp.eq.s32.totalorder %s23, 1
    %p214 = por %p212, %p213
    %p216 = scmp.ne.s32.totalorder %s201, %s215
    %p217 = scmp.eq.s32.totalorder %s23, 0
    %p218 = por %p216, %p217
    %s220 = sadd.s32 %s219, 1
    %p223 = scmp.eq.s32.totalorder %s17, 1
    %p224 = scmp.ne.s32.totalorder %s219, %s221
    %p225 = scmp.eq.s32.totalorder %s17, 0
    %p226 = por %p224, %p225
    %p227 = scmp.ne.s32.totalorder %s219, %s221
    %p228 = scmp.eq.s32.totalorder %s22, 1
    %p229 = por %p227, %p228
    %p230 = scmp.ne.s32.totalorder %s221, %s222
    %p231 = scmp.eq.s32.totalorder %s22, 0
    %p232 = por %p230, %p231
    %p233 = scmp.ne.s32.totalorder %s221, %s222
    %p234 = scmp.eq.s32.totalorder %s23, 1
    %p235 = por %p233, %p234
    %p237 = scmp.ne.s32.totalorder %s222, %s236
    %p238 = scmp.eq.s32.totalorder %s23, 0
    %p239 = por %p237, %p238
    %s241 = sadd.s32 %s240, 1
    %p244 = scmp.eq.s32.totalorder %s17, 1
    %p245 = scmp.ne.s32.totalorder %s240, %s242
    %p246 = scmp.eq.s32.totalorder %s17, 0
    %p247 = por %p245, %p246
    %p248 = scmp.ne.s32.totalorder %s240, %s242
    %p249 = scmp.eq.s32.totalorder %s22, 1
    %p250 = por %p248, %p249
    %p251 = scmp.ne.s32.totalorder %s242, %s243
    %p252 = scmp.eq.s32.totalorder %s22, 0
    %p253 = por %p251, %p252
    %p254 = scmp.ne.s32.totalorder %s242, %s243
    %p255 = scmp.eq.s32.totalorder %s23, 1
    %p256 = por %p254, %p255
    %p258 = scmp.ne.s32.totalorder %s243, %s257
    %p259 = scmp.eq.s32.totalorder %s23, 0
    %p260 = por %p258, %p259
    %s261 = ssub.s32 %s17, %s24
    %p262 = scmp.eq.s32.totalorder %s261, 0
    %s264 = sadd.s32 %s263, 1
    %s265 = scalar_select %p262, %s263, %s264
    %p268 = pneg %p262
    %p269 = scmp.eq.s32.totalorder %s17, 1
    %p270 = por %p268, %p269
    %p271 = scmp.ne.s32.totalorder %s263, %s266
    %p272 = scmp.eq.s32.totalorder %s17, 0
    %p273 = por %p271, %p272
    %p274 = scmp.ne.s32.totalorder %s263, %s266
    %p275 = scmp.eq.s32.totalorder %s22, 1
    %p276 = por %p274, %p275
    %p277 = scmp.ne.s32.totalorder %s266, %s267
    %p278 = scmp.eq.s32.totalorder %s22, 0
    %p279 = por %p277, %p278
    %p280 = scmp.ne.s32.totalorder %s266, %s267
    %p281 = scmp.eq.s32.totalorder %s23, 1
    %p282 = por %p280, %p281
    %p284 = scmp.ne.s32.totalorder %s267, %s283
    %p285 = scmp.eq.s32.totalorder %s23, 0
    %p286 = por %p284, %p285
    %p287 = scmp.le.s32.totalorder 1, %s17
    %p288 = scmp.lt.s32.totalorder %s17, 3
    %p289 = pnand %p287, %p288
    %p290 = pneg %p289
    // Predicated region
    $region9: #{dual_path_block_forward.1} parent=5 // pred_check
      _
    $region10: #{dual_path_block_forward.1} parent=5 // pred_check_branch
      %292 = sbr.rel (%p289) target = $region12
    $region11: #{dual_path_block_forward.1} parent=5 // pred_region
      %s293 = ssub.s32 %s17, 1
      // Predicated region
      $region13: #{dual_path_block_forward.1} parent=11 // pred_check
        %p294 = pneg %p64
      $region14: #{dual_path_block_forward.1} parent=11 // pred_check_branch
        %296 = sbr.rel (%p294) target = $region16
      $region15: #{dual_path_block_forward.1} parent=11 // pred_region
        _
      $region16: #{dual_path_block_forward.1} parent=11 // pred_fallthru
        _
      // Predicated region
      $region17: #{dual_path_block_forward.1} parent=11 // pred_check
        %p297 = pneg %p85
      $region18: #{dual_path_block_forward.1} parent=11 // pred_check_branch
        %299 = sbr.rel (%p297) target = $region20
      $region19: #{dual_path_block_forward.1} parent=11 // pred_region
        _
      $region20: #{dual_path_block_forward.1} parent=11 // pred_fallthru
        _
      // Predicated region
      $region21: #{dual_path_block_forward.1} parent=11 // pred_check
        %p300 = pneg %p106
      $region22: #{dual_path_block_forward.1} parent=11 // pred_check_branch
        %302 = sbr.rel (%p300) target = $region24
      $region23: #{dual_path_block_forward.1} parent=11 // pred_region
        _
      $region24: #{dual_path_block_forward.1} parent=11 // pred_fallthru
        _
      // Predicated region
      $region25: #{dual_path_block_forward.1} parent=11 // pred_check
        %p303 = pneg %p127
      $region26: #{dual_path_block_forward.1} parent=11 // pred_check_branch
        %305 = sbr.rel (%p303) target = $region28
      $region27: #{dual_path_block_forward.1} parent=11 // pred_region
        _
      $region28: #{dual_path_block_forward.1} parent=11 // pred_fallthru
        _
      // Predicated region
      $region29: #{dual_path_block_forward.1} parent=11 // pred_check
        %p306 = pneg %p148
      $region30: #{dual_path_block_forward.1} parent=11 // pred_check_branch
        %308 = sbr.rel (%p306) target = $region32
      $region31: #{dual_path_block_forward.1} parent=11 // pred_region
        _
      $region32: #{dual_path_block_forward.1} parent=11 // pred_fallthru
        _
      // Predicated region
      $region33: #{dual_path_block_forward.1} parent=11 // pred_check
        %p309 = pneg %p169
      $region34: #{dual_path_block_forward.1} parent=11 // pred_check_branch
        %311 = sbr.rel (%p309) target = $region36
      $region35: #{dual_path_block_forward.1} parent=11 // pred_region
        _
      $region36: #{dual_path_block_forward.1} parent=11 // pred_fallthru
        _
      // Predicated region
      $region37: #{dual_path_block_forward.1} parent=11 // pred_check
        %p312 = pneg %p190
      $region38: #{dual_path_block_forward.1} parent=11 // pred_check_branch
        %314 = sbr.rel (%p312) target = $region40
      $region39: #{dual_path_block_forward.1} parent=11 // pred_region
        _
      $region40: #{dual_path_block_forward.1} parent=11 // pred_fallthru
        _
      // Predicated region
      $region41: #{dual_path_block_forward.1} parent=11 // pred_check
        %p315 = pneg %p211
      $region42: #{dual_path_block_forward.1} parent=11 // pred_check_branch
        %317 = sbr.rel (%p315) target = $region44
      $region43: #{dual_path_block_forward.1} parent=11 // pred_region
        _
      $region44: #{dual_path_block_forward.1} parent=11 // pred_fallthru
        _
      // Predicated region
      $region45: #{dual_path_block_forward.1} parent=11 // pred_check
        %p318 = pneg %p232
      $region46: #{dual_path_block_forward.1} parent=11 // pred_check_branch
        %320 = sbr.rel (%p318) target = $region48
      $region47: #{dual_path_block_forward.1} parent=11 // pred_region
        _
      $region48: #{dual_path_block_forward.1} parent=11 // pred_fallthru
        _
      // Predicated region
      $region49: #{dual_path_block_forward.1} parent=11 // pred_check
        %p321 = pneg %p253
      $region50: #{dual_path_block_forward.1} parent=11 // pred_check_branch
        %323 = sbr.rel (%p321) target = $region52
      $region51: #{dual_path_block_forward.1} parent=11 // pred_region
        _
      $region52: #{dual_path_block_forward.1} parent=11 // pred_fallthru
        _
    $region12: #{dual_path_block_forward.1} parent=5 // pred_fallthru
      _
    %p324 = scmp.lt.s32.totalorder %s17, 2
    // Predicated region
    $region53: #{dual_path_block_forward.1} parent=5 // pred_check
      %p325 = pneg %p324
    $region54: #{dual_path_block_forward.1} parent=5 // pred_check_branch
      %327 = sbr.rel (%p325) target = $region56
    $region55: #{dual_path_block_forward.1} parent=5 // pred_region
      // Predicated region
      $region57: #{dual_path_block_forward.1} parent=55 // pred_check
        %p328 = pneg %p37
      $region58: #{dual_path_block_forward.1} parent=55 // pred_check_branch
        %330 = sbr.rel (%p328) target = $region60
      $region59: #{dual_path_block_forward.1} parent=55 // pred_region
        %p331 = scmp.lt.s32.totalorder %s17, 1
        %s332 = scalar_select %p331, %s17, 1
        %s333 = smul.addr %s332, 4
        %s334 = smul.addr %s333, 8
        %s335 = scalar_lea.vmem %s0, %s334
      $region60: #{dual_path_block_forward.1} parent=55 // pred_fallthru
        _
    $region56: #{dual_path_block_forward.1} parent=5 // pred_fallthru
      _
    %p336 = scmp.le.s32.totalorder 1, %s17
    %p337 = scmp.lt.s32.totalorder %s17, 3
    %p338 = pnand %p336, %p337
    %p339 = pneg %p338
    // Predicated region
    $region61: #{dual_path_block_forward.1} parent=5 // pred_check
      _
    $region62: #{dual_path_block_forward.1} parent=5 // pred_check_branch
      %341 = sbr.rel (%p338) target = $region64
    $region63: #{dual_path_block_forward.1} parent=5 // pred_region
      %s342 = ssub.s32 %s17, 1
      %p343 = scmp.lt.s32.totalorder %s22, 1
      %s344 = scalar_select %p343, %s22, 1
      %s345 = smul.addr %s344, 4
      %s346 = smul.addr %s345, 8
      %s347 = scalar_lea.vmem %s0, %s346
      %p348 = pneg %p43
      %p349 = pneg %p40
      %p350 = pneg %p64
      %p351 = pneg %p61
      %p352 = pneg %p85
      %p353 = pneg %p82
      %p354 = pneg %p106
      %p355 = pneg %p103
      %p356 = pneg %p127
      %p357 = pneg %p124
      %p358 = pneg %p148
      %p359 = pneg %p145
      %p360 = pneg %p169
      %p361 = pneg %p166
      %p362 = pneg %p190
      %p363 = pneg %p187
      %p364 = pneg %p211
      %p365 = pneg %p208
      %p366 = pneg %p232
      %p367 = pneg %p229
      %p368 = pneg %p253
      %p369 = pneg %p250
      %p370 = pneg %p279
      %p371 = pneg %p276
      %p372 = scmp.lt.s32.totalorder %s22, 1
      %s373 = scalar_select %p372, %s22, 1
      %s374 = smul.addr %s373, 10
      %s375 = smul.addr %s374, 8
      %s376 = scalar_lea.vmem %s11, %s375
      %p377 = scmp.lt.s32.totalorder %s22, 1
      %s378 = scalar_select %p377, %s22, 1
      %s379 = smul.addr %s378, 4
      %s380 = smul.addr %s379, 8
      %s381 = scalar_lea.vmem %s0, %s380
      %p382 = scmp.lt.s32.totalorder %s22, 1
      %s383 = scalar_select %p382, %s22, 1
      %s384 = smul.addr %s383, 10
      %s385 = smul.addr %s384, 8
      %s386 = scalar_lea.vmem %s11, %s385
      %v390 = vld [vmem:[%s381] sm:$0xff]
      %v391 = vld [vmem:[%s381 + $0x8] sm:$0xff]
      %v392 = vld [vmem:[%s381 + $0x10] sm:$0xff]
      %v393 = vld [vmem:[%s381 + $0x18] sm:$0xff]
      %v394 = vld [vmem:[%s1] sm:$0xff]
      %v395 = vld [vmem:[%s1 + $0x8] sm:$0xff]
      %397 = vset.pattern.permute.xlu0 0
      %398 = vperm.xlu0 %397, %v394
      %v399 = vpop.permute.xlu0 %398
      %402 = vset.pattern.permute.xlu0 0
      %403 = vperm.xlu0 %402, %v395
      %v404 = vpop.permute.xlu0 %403
      %v406 = vmul.f32 %v390, %v399
      %v407 = vmul.f32 %v391, %v399
      %v408 = vmul.f32 %v392, %v404
      %v409 = vmul.f32 %v393, %v404
      %v410 = vld [vmem:[%s2] sm:$0xff]
      %v411 = vld [vmem:[%s2 + $0x8] sm:$0xff]
      %413 = vset.pattern.permute.xlu0 0
      %414 = vperm.xlu0 %413, %v410
      %v415 = vpop.permute.xlu0 %414
      %418 = vset.pattern.permute.xlu0 0
      %419 = vperm.xlu0 %418, %v411
      %v420 = vpop.permute.xlu0 %419
      %v422 = vadd.f32 %v406, %v415
      %v423 = vadd.f32 %v407, %v415
      %v424 = vadd.f32 %v408, %v420
      %v425 = vadd.f32 %v409, %v420
      %v426 = vmax.f32 %v422, 0.0
      %v427 = vmax.f32 %v423, 0.0
      %v428 = vmax.f32 %v424, 0.0
      %v429 = vmax.f32 %v425, 0.0
      %v430 = vpack.c.bf16 %v428, %v426
      %v431 = vpack.c.bf16 %v429, %v427
      %v432 = vld [vmem:[%s5] sm:$0xf]
      %v433 = vld [vmem:[%s5 + $0x4] sm:$0xf]
      %v434 = vld [vmem:[%s3] sm:$0xff]
      %v435 = vld [vmem:[%s3 + $0x8] sm:$0xff]
      %437 = vset.pattern.permute.xlu0 0
      %438 = vperm.xlu0 %437, %v434
      %v439 = vpop.permute.xlu0 %438
      %442 = vset.pattern.permute.xlu0 0
      %443 = vperm.xlu0 %442, %v435
      %v444 = vpop.permute.xlu0 %443
      %v448 = vunpack.c.l.b16 %v432
      %v449 = vunpack.c.l.b16 %v433
      %v450 = vpack.c.b16 %v449, %v448
      %vm451 = vcmask 130048
      %v453 = vsel %vm451, %v450, 0
      %455 = vmatpush.bf16.msra.mxu0 0
      %456 = vmatpush.bf16.msra.mxu0 0
      %457 = vmatpush.bf16.msra.mxu0 0
      %458 = vmatpush.bf16.msra.mxu0 0
      %459 = vmatpush.bf16.msra.mxu0 0
      %460 = vmatpush.bf16.msra.mxu0 0
      %461 = vmatpush.bf16.msra.mxu0 0
      %462 = vmatpush.bf16.msra.mxu0 %v430
      %463 = vmatmul.bf16.gmra.mxu0 %v453
      %v464 = vpop.f32.mrf.mxu0
      %v465 = vadd.f32 %v439, %v464
      %v466 = vpop.f32.mrf.mxu0
      %v467 = vadd.f32 %v444, %v466
      %468 = vdwg.mxu0
      %469 = vmatpush.bf16.msra.mxu0 0
      %470 = vmatpush.bf16.msra.mxu0 0
      %471 = vmatpush.bf16.msra.mxu0 0
      %472 = vmatpush.bf16.msra.mxu0 0
      %473 = vmatpush.bf16.msra.mxu0 0
      %474 = vmatpush.bf16.msra.mxu0 0
      %475 = vmatpush.bf16.msra.mxu0 0
      %476 = vmatpush.bf16.msra.mxu0 %v431
      %477 = vmatmul.bf16.gmra.mxu0 %v453
      %v478 = vpop.f32.mrf.mxu0
      %v479 = vadd.f32 %v439, %v478
      %v480 = vpop.f32.mrf.mxu0
      %v481 = vadd.f32 %v444, %v480
      %482 = vdwg.mxu0
      %v483 = vmax.f32 %v465, 0.0
      %v484 = vmax.f32 %v479, 0.0
      %v485 = vmax.f32 %v467, 0.0
      %v486 = vmax.f32 %v481, 0.0
      %v487 = vpack.c.bf16 %v484, %v483
      %v488 = vpack.c.bf16 %v486, %v485
      %v489 = vlaneseq
      %v490 = vand.u32 %v489, 127
      %v491 = vadd.s32 %v490, 128
      %vm492 = vcmp.lt.s32.totalorder %v490, 0
      %v493 = vsub.s32 0, %v490
      %v494 = vsel %vm492, %v493, %v490
      %v495 = vshrl.u32 %v494, 4
      %v496 = vand.u32 %v494, 15
      %v497 = vsub.s32 0, %v496
      %v498 = vsel %vm492, %v497, %v496
      %vm499 = vcmp.lt.s32.totalorder %v491, 0
      %v500 = vsub.s32 0, %v491
      %v501 = vsel %vm499, %v500, %v491
      %v502 = vshrl.u32 %v501, 4
      %v503 = vand.u32 %v501, 15
      %v504 = vsub.s32 0, %v503
      %v505 = vsel %vm499, %v504, %v503
      %vm506 = vcmp.ne.s32.totalorder %v498, 0
      %vm507 = vcmp.ne.s32.totalorder %v505, 0
      %vm508 = vcmp.lt.s32.totalorder %v498, 0
      %vm509 = vcmp.lt.s32.totalorder %v505, 0
      %vm510 = vmand %vm508, %vm506
      %vm511 = vmand %vm509, %vm507
      %v512 = vadd.s32 %v498, 16
      %v513 = vadd.s32 %v505, 16
      %v514 = vsel %vm510, %v512, %v498
      %v515 = vsel %vm511, %v513, %v505
      %vm516 = vcmp.ge.s32.totalorder %v514, 1
      %vm517 = vcmp.ge.s32.totalorder %v515, 1
      %vm518 = vcmp.lt.s32.totalorder %v514, 15
      %vm519 = vcmp.lt.s32.totalorder %v515, 15
      %v522 = vunpack.c.l.b16 %v487
      %v523 = vunpack.c.h.b16 %v487
      %v524 = vunpack.c.l.b16 %v488
      %v525 = vunpack.c.h.b16 %v488
      %v526 = vpack.c.b16 %v524, %v522
      %v527 = vpack.c.b16 %v525, %v523
      %528 = vrot.lane.b32.xlu0 %v526, 17
      %v529 = vpop.permute.xlu0 %528
      %530 = vrot.lane.b32.xlu0 %v527, 17
      %v531 = vpop.permute.xlu0 %530
      %vm532 = vcmask 138240
      %v533 = vsel %vm532, %v529, %v531
      %vm535 = vcmask 138240
      %v538 = vsel %vm535, 0, %v529
      %vm540 = vmpackc.low %vm517, %vm516
      %v541 = vsel %vm540, 65537, 0
      %v542 = vperm.slane %v541, 0
      %v543 = vperm.slane %v541, 4
      %v544 = vunpack.c.l.b16 %v542
      %v545 = vunpack.c.h.b16 %v542
      %v546 = vunpack.c.l.b16 0
      %v547 = vunpack.c.h.b16 0
      %vm548 = vcmp.ne.s32.totalorder %v544, %v546
      %vm549 = vcmp.ne.s32.totalorder %v545, %v547
      %vm550 = vmpackc.low %vm549, %vm548
      %v551 = vunpack.c.l.b16 %v543
      %v552 = vunpack.c.h.b16 %v543
      %v553 = vunpack.c.l.b16 0
      %v554 = vunpack.c.h.b16 0
      %vm555 = vcmp.ne.s32.totalorder %v551, %v553
      %vm556 = vcmp.ne.s32.totalorder %v552, %v554
      %vm557 = vmpackc.low %vm556, %vm555
      %v558 = vsel %vm550, %v538, 0
      %v559 = vsel %vm557, %v533, 0
      %560 = vrot.lane.b32.xlu0 %v526, 16
      %v561 = vpop.permute.xlu0 %560
      %562 = vrot.lane.b32.xlu0 %v527, 16
      %v563 = vpop.permute.xlu0 %562
      %vm564 = vcmask 130048
      %v565 = vsel %vm564, %v561, %v563
      %v568 = vsel %vm451, 0, %v561
      %570 = vrot.lane.b32.xlu0 %v526, 15
      %v571 = vpop.permute.xlu0 %570
      %572 = vrot.lane.b32.xlu0 %v527, 15
      %v573 = vpop.permute.xlu0 %572
      %vm574 = vcmask 121856
      %v575 = vsel %vm574, %v571, %v573
      %vm577 = vcmask 121856
      %v579 = vsel %vm577, 0, %v571
      %vm581 = vmpackc.low %vm519, %vm518
      %v582 = vsel %vm581, 65537, 0
      %v583 = vperm.slane %v582, 0
      %v584 = vperm.slane %v582, 4
      %v585 = vunpack.c.l.b16 %v583
      %v586 = vunpack.c.h.b16 %v583
      %v587 = vunpack.c.l.b16 0
      %v588 = vunpack.c.h.b16 0
      %vm589 = vcmp.ne.s32.totalorder %v585, %v587
      %vm590 = vcmp.ne.s32.totalorder %v586, %v588
      %vm591 = vmpackc.low %vm590, %vm589
      %v592 = vunpack.c.l.b16 %v584
      %v593 = vunpack.c.h.b16 %v584
      %v594 = vunpack.c.l.b16 0
      %v595 = vunpack.c.h.b16 0
      %vm596 = vcmp.ne.s32.totalorder %v592, %v594
      %vm597 = vcmp.ne.s32.totalorder %v593, %v595
      %vm598 = vmpackc.low %vm597, %vm596
      %v599 = vsel %vm591, %v579, 0
      %v600 = vsel %vm598, %v575, 0
      %601 = vrot.lane.b32.xlu0 %v526, 1
      %v602 = vpop.permute.xlu0 %601
      %603 = vrot.lane.b32.xlu0 %v527, 1
      %v604 = vpop.permute.xlu0 %603
      %vm605 = vcmask 7168
      %v606 = vsel %vm605, %v602, %v604
      %vm608 = vcmask 7168
      %v610 = vsel %vm608, 0, %v602
      %v612 = vsel %vm550, %v610, 0
      %v613 = vsel %vm557, %v606, 0
      %614 = vrot.lane.b32.xlu0 %v526, 127
      %v615 = vpop.permute.xlu0 %614
      %616 = vrot.lane.b32.xlu0 %v527, 127
      %v617 = vpop.permute.xlu0 %616
      %vm618 = vcmask 1039360
      %v619 = vsel %vm618, %v615, %v617
      %vm621 = vcmask 1039360
      %v623 = vsel %vm621, %v617, 0
      %v625 = vsel %vm591, %v619, 0
      %v626 = vsel %vm598, %v623, 0
      %627 = vrot.lane.b32.xlu0 %v526, 113
      %v628 = vpop.permute.xlu0 %627
      %629 = vrot.lane.b32.xlu0 %v527, 113
      %v630 = vpop.permute.xlu0 %629
      %vm631 = vcmask 924672
      %v632 = vsel %vm631, %v628, %v630
      %vm634 = vcmask 924672
      %v636 = vsel %vm634, %v630, 0
      %v638 = vsel %vm550, %v632, 0
      %v639 = vsel %vm557, %v636, 0
      %640 = vrot.lane.b32.xlu0 %v526, 112
      %v641 = vpop.permute.xlu0 %640
      %642 = vrot.lane.b32.xlu0 %v527, 112
      %v643 = vpop.permute.xlu0 %642
      %vm644 = vcmask 916480
      %v645 = vsel %vm644, %v641, %v643
      %vm647 = vcmask 916480
      %v649 = vsel %vm647, %v643, 0
      %651 = vrot.lane.b32.xlu0 %v526, 111
      %v652 = vpop.permute.xlu0 %651
      %653 = vrot.lane.b32.xlu0 %v527, 111
      %v654 = vpop.permute.xlu0 %653
      %vm655 = vcmask 908288
      %v656 = vsel %vm655, %v652, %v654
      %vm658 = vcmask 908288
      %v660 = vsel %vm658, %v654, 0
      %v662 = vsel %vm591, %v656, 0
      %v663 = vsel %vm598, %v660, 0
      %v666 = vld [vmem:[%s6] sm:$0xff]
      %v667 = vld [vmem:[%s6 + $0x8] sm:$0xff]
      %v668 = vld [vmem:[%s4] sm:$0xff]
      %v669 = vld [vmem:[%s4 + $0x8] sm:$0xff]
      %671 = vset.pattern.permute.xlu0 0
      %672 = vperm.xlu0 %671, %v668
      %v673 = vpop.permute.xlu0 %672
      %676 = vset.pattern.permute.xlu0 0
      %677 = vperm.xlu0 %676, %v669
      %v678 = vpop.permute.xlu0 %677
      %v682 = vunpack.c.l.b16 %v666
      %v683 = vunpack.c.h.b16 %v666
      %v684 = vunpack.c.l.b16 %v667
      %v685 = vunpack.c.h.b16 %v667
      %v686 = vpack.c.b16 %v684, %v682
      %v687 = vpack.c.b16 %v685, %v683
      %v690 = vsel %vm451, %v687, 0
      %692 = vmatpush.bf16.msra.mxu0 %v645
      %693 = vmatpush.bf16.msra.mxu0 %v638
      %694 = vmatpush.bf16.msra.mxu0 %v625
      %695 = vmatpush.bf16.msra.mxu0 %v526
      %696 = vmatpush.bf16.msra.mxu0 %v612
      %697 = vmatpush.bf16.msra.mxu0 %v599
      %698 = vmatpush.bf16.msra.mxu0 %v568
      %699 = vmatpush.bf16.msra.mxu0 %v558
      %700 = vmatmul.bf16.gmra.mxu0 %v686
      %v701 = vpop.f32.mrf.mxu0
      %v702 = vadd.f32 %v673, %v701
      %v703 = vpop.f32.mrf.mxu0
      %v704 = vadd.f32 %v678, %v703
      %705 = vdwg.mxu0
      %706 = vmatpush.bf16.msra.mxu0 0
      %707 = vmatpush.bf16.msra.mxu0 0
      %708 = vmatpush.bf16.msra.mxu0 0
      %709 = vmatpush.bf16.msra.mxu0 0
      %710 = vmatpush.bf16.msra.mxu0 0
      %711 = vmatpush.bf16.msra.mxu0 0
      %712 = vmatpush.bf16.msra.mxu0 0
      %713 = vmatpush.bf16.msra.mxu0 %v662
      %714 = vmatmul.bf16.gmra.mxu0 %v690
      %v715 = vpop.f32.mrf.mxu0
      %v716 = vadd.f32 %v702, %v715
      %v717 = vpop.f32.mrf.mxu0
      %v718 = vadd.f32 %v704, %v717
      %719 = vdwg.mxu0
      %720 = vmatpush.bf16.msra.mxu0 %v649
      %721 = vmatpush.bf16.msra.mxu0 %v639
      %722 = vmatpush.bf16.msra.mxu0 %v626
      %723 = vmatpush.bf16.msra.mxu0 %v527
      %724 = vmatpush.bf16.msra.mxu0 %v613
      %725 = vmatpush.bf16.msra.mxu0 %v600
      %726 = vmatpush.bf16.msra.mxu0 %v565
      %727 = vmatpush.bf16.msra.mxu0 %v559
      %728 = vmatmul.bf16.gmra.mxu0 %v686
      %v729 = vpop.f32.mrf.mxu0
      %v730 = vadd.f32 %v673, %v729
      %v731 = vpop.f32.mrf.mxu0
      %v732 = vadd.f32 %v678, %v731
      %733 = vdwg.mxu0
      %734 = vmatpush.bf16.msra.mxu0 0
      %735 = vmatpush.bf16.msra.mxu0 0
      %736 = vmatpush.bf16.msra.mxu0 0
      %737 = vmatpush.bf16.msra.mxu0 0
      %738 = vmatpush.bf16.msra.mxu0 0
      %739 = vmatpush.bf16.msra.mxu0 0
      %740 = vmatpush.bf16.msra.mxu0 0
      %741 = vmatpush.bf16.msra.mxu0 %v663
      %742 = vmatmul.bf16.gmra.mxu0 %v690
      %v743 = vpop.f32.mrf.mxu0
      %v744 = vadd.f32 %v730, %v743
      %v745 = vpop.f32.mrf.mxu0
      %v746 = vadd.f32 %v732, %v745
      %747 = vdwg.mxu0
      %v748 = vmax.f32 %v716, 0.0
      %v749 = vmax.f32 %v744, 0.0
      %v750 = vmax.f32 %v718, 0.0
      %v751 = vmax.f32 %v746, 0.0
      %v752 = vpack.c.bf16 %v750, %v748
      %v753 = vpack.c.bf16 %v751, %v749
      %v754 = vld [vmem:[%s7] sm:$0xf]
      %v755 = vld [vmem:[%s7 + $0x4] sm:$0xf]
      %v756 = vld [vmem:[%s7 + $0x8] sm:$0xf]
      %v760 = vunpack.c.l.b16 %v754
      %v761 = vunpack.c.l.b16 %v755
      %v762 = vunpack.c.l.b16 %v756
      %v763 = vpack.c.b16 %v761, %v760
      %v764 = vpack.c.b16 %v762, %v762
      %v766 = vsel %vm451, %v763, 0
      %v769 = vsel %vm451, %v764, 0
      %771 = vmatpush.bf16.msra.mxu0 0
      %772 = vmatpush.bf16.msra.mxu0 0
      %773 = vmatpush.bf16.msra.mxu0 0
      %774 = vmatpush.bf16.msra.mxu0 0
      %775 = vmatpush.bf16.msra.mxu0 0
      %776 = vmatpush.bf16.msra.mxu0 0
      %777 = vmatpush.bf16.msra.mxu0 0
      %778 = vmatpush.bf16.msra.mxu0 %v752
      %779 = vmatmul.bf16.gmra.mxu0 %v766
      %v780 = vpop.f32.mrf.mxu0
      %v781 = vadd.f32 0.0, %v780
      %v782 = vpop.f32.mrf.mxu0
      %v783 = vadd.f32 0.0, %v782
      %784 = vmatmul.bf16.gmra.mxu0 %v769
      %v785 = vpop.f32.mrf.mxu0
      %v786 = vadd.f32 0.0, %v785
      %v787 = vpop.f32.mrf.mxu0
      %788 = vdwg.mxu0
      %789 = vmatpush.bf16.msra.mxu0 0
      %790 = vmatpush.bf16.msra.mxu0 0
      %791 = vmatpush.bf16.msra.mxu0 0
      %792 = vmatpush.bf16.msra.mxu0 0
      %793 = vmatpush.bf16.msra.mxu0 0
      %794 = vmatpush.bf16.msra.mxu0 0
      %795 = vmatpush.bf16.msra.mxu0 0
      %796 = vmatpush.bf16.msra.mxu0 %v753
      %797 = vmatmul.bf16.gmra.mxu0 %v766
      %v798 = vpop.f32.mrf.mxu0
      %v799 = vadd.f32 0.0, %v798
      %v800 = vpop.f32.mrf.mxu0
      %v801 = vadd.f32 0.0, %v800
      %802 = vmatmul.bf16.gmra.mxu0 %v769
      %v803 = vpop.f32.mrf.mxu0
      %v804 = vadd.f32 0.0, %v803
      %v805 = vpop.f32.mrf.mxu0
      %806 = vdwg.mxu0
      %v807 = vld [vmem:[%s8] sm:$0xff]
      %v808 = vld [vmem:[%s8 + $0x8] sm:$0xff]
      %810 = vset.pattern.permute.xlu0 0
      %811 = vperm.xlu0 %810, %v807
      %v812 = vpop.permute.xlu0 %811
      %815 = vset.pattern.permute.xlu0 0
      %816 = vperm.xlu0 %815, %v808
      %v817 = vpop.permute.xlu0 %816
      %v819 = vmul.f32 %v390, %v812
      %v820 = vmul.f32 %v391, %v812
      %v821 = vmul.f32 %v392, %v817
      %v822 = vmul.f32 %v393, %v817
      %v823 = vld [vmem:[%s9] sm:$0xff]
      %v824 = vld [vmem:[%s9 + $0x8] sm:$0xff]
      %826 = vset.pattern.permute.xlu0 0
      %827 = vperm.xlu0 %826, %v823
      %v828 = vpop.permute.xlu0 %827
      %831 = vset.pattern.permute.xlu0 0
      %832 = vperm.xlu0 %831, %v824
      %v833 = vpop.permute.xlu0 %832
      %v835 = vadd.f32 %v819, %v828
      %v836 = vadd.f32 %v820, %v828
      %v837 = vadd.f32 %v821, %v833
      %v838 = vadd.f32 %v822, %v833
      %v839 = vmax.f32 %v835, 0.0
      %v840 = vmax.f32 %v836, 0.0
      %v841 = vmax.f32 %v837, 0.0
      %v842 = vmax.f32 %v838, 0.0
      %v843 = vpack.c.bf16 %v841, %v839
      %v844 = vpack.c.bf16 %v842, %v840
      %v845 = vld [vmem:[%s10] sm:$0xf]
      %v846 = vld [vmem:[%s10 + $0x4] sm:$0xf]
      %v847 = vld [vmem:[%s10 + $0x8] sm:$0xf]
      %v848 = vld [vmem:[%s10 + $0xc] sm:$0xf]
      %v853 = vunpack.c.l.b16 %v845
      %v854 = vunpack.c.l.b16 %v846
      %v855 = vunpack.c.l.b16 %v847
      %v856 = vunpack.c.l.b16 %v848
      %v857 = vpack.c.b16 %v854, %v853
      %v858 = vpack.c.b16 %v856, %v855
      %v860 = vsel %vm451, %v857, 0
      %v863 = vsel %vm451, %v858, 0
      %865 = vmatpush.bf16.msra.mxu0 0
      %866 = vmatpush.bf16.msra.mxu0 0
      %867 = vmatpush.bf16.msra.mxu0 0
      %868 = vmatpush.bf16.msra.mxu0 0
      %869 = vmatpush.bf16.msra.mxu0 0
      %870 = vmatpush.bf16.msra.mxu0 0
      %871 = vmatpush.bf16.msra.mxu0 0
      %872 = vmatpush.bf16.msra.mxu0 %v843
      %873 = vmatmul.bf16.gmra.mxu0 %v860
      %v874 = vpop.f32.mrf.mxu0
      %v875 = vadd.f32 0.0, %v874
      %v876 = vpop.f32.mrf.mxu0
      %v877 = vadd.f32 0.0, %v876
      %878 = vmatmul.bf16.gmra.mxu0 %v863
      %v879 = vpop.f32.mrf.mxu0
      %v880 = vadd.f32 0.0, %v879
      %v881 = vpop.f32.mrf.mxu0
      %v882 = vadd.f32 0.0, %v881
      %883 = vdwg.mxu0
      %884 = vmatpush.bf16.msra.mxu0 0
      %885 = vmatpush.bf16.msra.mxu0 0
      %886 = vmatpush.bf16.msra.mxu0 0
      %887 = vmatpush.bf16.msra.mxu0 0
      %888 = vmatpush.bf16.msra.mxu0 0
      %889 = vmatpush.bf16.msra.mxu0 0
      %890 = vmatpush.bf16.msra.mxu0 0
      %891 = vmatpush.bf16.msra.mxu0 %v844
      %892 = vmatmul.bf16.gmra.mxu0 %v860
      %v893 = vpop.f32.mrf.mxu0
      %v894 = vadd.f32 0.0, %v893
      %v895 = vpop.f32.mrf.mxu0
      %v896 = vadd.f32 0.0, %v895
      %897 = vmatmul.bf16.gmra.mxu0 %v863
      %v898 = vpop.f32.mrf.mxu0
      %v899 = vadd.f32 0.0, %v898
      %v900 = vpop.f32.mrf.mxu0
      %v901 = vadd.f32 0.0, %v900
      %902 = vdwg.mxu0
      %v903 = vadd.f32 %v875, %v781
      %v904 = vadd.f32 %v894, %v799
      %v905 = vadd.f32 %v877, %v783
      %v906 = vadd.f32 %v896, %v801
      %907 = vst [vmem:[%s386] sm:$0xff] %v903
      %908 = vst [vmem:[%s386 + $0x8] sm:$0xff] %v904
      %909 = vst [vmem:[%s386 + $0x10] sm:$0xff] %v905
      %910 = vst [vmem:[%s386 + $0x18] sm:$0xff] %v906
      %911 = vst [vmem:[%s386 + $0x20] sm:$0xff] %v880
      %912 = vst [vmem:[%s386 + $0x28] sm:$0xff] %v899
      %913 = vst [vmem:[%s386 + $0x30] sm:$0xff] %v882
      %914 = vst [vmem:[%s386 + $0x38] sm:$0xff] %v901
      %915 = vst [vmem:[%s386 + $0x40] sm:$0xff] %v786
      %916 = vst [vmem:[%s386 + $0x48] sm:$0xff] %v804
      %p917 = scmp.lt.s32.totalorder %s22, 1
      %s918 = scalar_select %p917, %s22, 1
      %s919 = smul.addr %s918, 10
      %s920 = smul.addr %s919, 8
      %s921 = scalar_lea.vmem %s11, %s920
      // Predicated region
      $region65: #{dual_path_block_forward.1} parent=63 // pred_check
        %p922 = pneg %p276
      $region66: #{dual_path_block_forward.1} parent=63 // pred_check_branch
        %924 = sbr.rel (%p922) target = $region68
      $region67: #{dual_path_block_forward.1} parent=63 // pred_region
        _
      $region68: #{dual_path_block_forward.1} parent=63 // pred_fallthru
        _
    $region64: #{dual_path_block_forward.1} parent=5 // pred_fallthru
      _
    %p925 = scmp.le.s32.totalorder 2, %s17
    // Predicated region
    $region69: #{dual_path_block_forward.1} parent=5 // pred_check
      %p926 = pneg %p925
    $region70: #{dual_path_block_forward.1} parent=5 // pred_check_branch
      %928 = sbr.rel (%p926) target = $region72
    $region71: #{dual_path_block_forward.1} parent=5 // pred_region
      %s929 = ssub.s32 %s17, 2
      // Predicated region
      $region73: #{dual_path_block_forward.1} parent=71 // pred_check
        %p930 = pneg %p282
      $region74: #{dual_path_block_forward.1} parent=71 // pred_check_branch
        %932 = sbr.rel (%p930) target = $region76
      $region75: #{dual_path_block_forward.1} parent=71 // pred_region
        %p933 = scmp.lt.s32.totalorder %s23, 1
        %s934 = scalar_select %p933, %s23, 1
        %s935 = smul.addr %s934, 10
        %s936 = smul.addr %s935, 8
        %s937 = scalar_lea.vmem %s11, %s936
      $region76: #{dual_path_block_forward.1} parent=71 // pred_fallthru
        _
    $region72: #{dual_path_block_forward.1} parent=5 // pred_fallthru
      _
  $region6: #{dual_path_block_forward.1} parent=0 // loop_footer
    %s21 = sadd.s32 1, %s17
  $region7: #{dual_path_block_forward.1} parent=0 // loop_footer_branch
    %16 = sbr.rel target = $region3
  $region8: #{dual_path_block_forward.1} parent=0 // loop_exit
    _

</llo_original>
